<compile_context>
chip_gen: v7x
topology: tpu7x:2x2x1
jax: 0.10.0
libtpu: 0.0.40
codegen_flags: <defaults>
</compile_context>

<pallas_src>
import jax
import jax.numpy as jnp
import numpy as np
from jax.experimental import pallas as pl
from jax.experimental.pallas import tpu as pltpu


def _erf(x):
    # Abramowitz & Stegun 7.1.26 rational approximation, |abs err| < 1.5e-7
    # (float32-equivalent to torch.erf); exp + reciprocal go to the EUP.
    a1, a2, a3, a4, a5 = 0.254829592, -0.284496736, 1.421413741, -1.453152027, 1.061405429
    p = 0.3275911
    s = jnp.where(x >= 0.0, 1.0, -1.0)
    ax = jnp.abs(x)
    d = 1.0 + p * ax
    t = pl.reciprocal(d, approx=True)   # EUP slot (frees VALU)
    t = t * (2.0 - d * t)               # one Newton step -> ~full f32 precision
    poly = ((((a5 * t + a4) * t + a3) * t + a2) * t + a1) * t
    return s * (1.0 - poly * jnp.exp(-ax * ax))


def _convt_gelu_kernel(p_ref, w_ref, b_ref, o_ref):
    # p_ref: (N, KC, HW)   im2col patches, HW on lanes
    # w_ref: (Cout, KC)    pre-transposed flattened transposed-conv weight
    # b_ref: (Cout, 1)
    # o_ref: (N, Cout, HW) lane-dense output
    w = w_ref[...]
    b = b_ref[...]
    for n in range(p_ref.shape[0]):      # N is tiny & static -> unrolled
        v1 = jnp.dot(w, p_ref[n], preferred_element_type=jnp.float32) + b
        g = (v1 * 0.5) * (_erf(v1 * 0.7071067811865476) + 1.0)
        o_ref[n] = g.astype(o_ref.dtype)  # single full-lane store per image


def model_forward(x_nchw, w_t, bias):
    """x_nchw: (N, Cin, H, W); w_t: (Cin, Cout, 3, 3) PyTorch ConvTranspose2d weight; bias: (Cout,)."""
    N, Cin, H, W = x_nchw.shape
    CinW, Cout, kH, kW = w_t.shape
    assert CinW == Cin and (kH, kW) == (3, 3)
    HW = H * W
    KC = Cin * kH * kW

    # ConvTranspose2d(stride=1, pad=1) == Conv2d(pad=1) with in/out channels
    # swapped and the 3x3 taps spatially flipped. Flatten as (Cout, Cin*3*3) to
    # match the (ci, ky, kx) row ordering of the patches (tiny host-side op).
    wmat = jnp.transpose(jnp.flip(w_t, axis=(2, 3)), (1, 0, 2, 3)).reshape(Cout, KC)

    # im2col straight from NCHW (no layout transposes): rows ordered (ci, ky, kx),
    # columns are the H*W output pixels.
    # (For production sizes, fold this into the kernel as 9 shifted matmuls on a
    #  VMEM-resident padded tile to avoid the 9x HBM expansion.)
    x_pad = jnp.pad(x_nchw, ((0, 0), (0, 0), (1, 1), (1, 1)))
    patches = jnp.stack(
        [x_pad[:, :, ky:ky + H, kx:kx + W] for ky in range(kH) for kx in range(kW)],
        axis=2,
    )  # (N, Cin, 9, H, W)
    patches = patches.reshape(N, KC, HW)

    out_flat = pl.pallas_call(
        _convt_gelu_kernel,
        out_shape=jax.ShapeDtypeStruct((N, Cout, HW), jnp.float32),
        grid=(1,),  # whole (tiny) problem in one step; no per-step pipeline overhead
        in_specs=[
            pl.BlockSpec((N, KC, HW), lambda i: (0, 0, 0)),
            pl.BlockSpec((Cout, KC), lambda i: (0, 0)),
            pl.BlockSpec((Cout, 1), lambda i: (0, 0)),
        ],
        out_specs=pl.BlockSpec((N, Cout, HW), lambda i: (0, 0, 0)),
        compiler_params=pltpu.CompilerParams(dimension_semantics=("arbitrary",)),
    )(patches, wmat, bias.reshape(Cout, 1))

    # Output already in NCHW channel order: free reshape, no transpose.
    return out_flat.reshape(N, Cout, H, W)


if __name__ == "__main__":
    key = jax.random.PRNGKey(0)
    kx, kw, kb = jax.random.split(key, 3)

    N, Cin, H, W, Cout = 2, 3, 16, 16, 8
    x = jax.random.normal(kx, (N, Cin, H, W), dtype=jnp.float32)
    # Deterministic synthetic parameters (PyTorch shapes: weight (Cin,Cout,3,3), bias (Cout,))
    w_t = jax.random.normal(kw, (Cin, Cout, 3, 3), dtype=jnp.float32) * 0.1
    bias = jax.random.normal(kb, (Cout,), dtype=jnp.float32) * 0.1

    out = jax.block_until_ready(model_forward(x, w_t, bias))

    # Pure-JAX reference (XLA conv + jax erf) for a correctness check.
    w_conv = jnp.transpose(jnp.flip(w_t, axis=(2, 3)), (1, 0, 2, 3))  # (Cout,Cin,3,3)
    v1 = jax.lax.conv_general_dilated(
        x, w_conv, window_strides=(1, 1), padding=((1, 1), (1, 1)),
        dimension_numbers=("NCHW", "OIHW", "NCHW"),
    ) + bias[None, :, None, None]
    ref = (v1 * 0.5) * (jax.scipy.special.erf(v1 * 0.7071067811865476) + 1.0)

    assert out.shape == (N, Cout, H, W)
    np.testing.assert_allclose(np.asarray(out), np.asarray(ref), rtol=1e-4, atol=1e-4)
    print("KERNEL_OK")
</pallas_src>

<mosaic_0001>
module attributes {stable_mosaic.version = 11 : i64} {
  func.func @_convt_gelu_kernel(%arg0: i32, %arg1: memref<2x27x256xf32, #tpu.memory_space<vmem>>, %arg2: memref<8x27xf32, #tpu.memory_space<vmem>>, %arg3: memref<8x1xf32, #tpu.memory_space<vmem>>, %arg4: memref<2x8x256xf32, #tpu.memory_space<vmem>>) attributes {dimension_semantics = [#tpu.dimension_semantics<arbitrary>], iteration_bounds = array<i64: 1>, scalar_prefetch = 0 : i64, scratch_operands = 0 : i64, tpu.core_type = #tpu.core_type<tc>, window_params = [{pipeline_mode = #tpu.pipeline_mode<synchronous>, transform_indices = @transform_0, window_bounds = array<i64: 2, 27, 256>}, {pipeline_mode = #tpu.pipeline_mode<synchronous>, transform_indices = @transform_1, window_bounds = array<i64: 8, 27>}, {pipeline_mode = #tpu.pipeline_mode<synchronous>, transform_indices = @transform_2, window_bounds = array<i64: 8, 1>}, {pipeline_mode = #tpu.pipeline_mode<synchronous>, transform_indices = @transform_3, window_bounds = array<i64: 2, 8, 256>}]} {
    %c0 = arith.constant 0 : index
    %c0_0 = arith.constant 0 : index
    %0 = vector.load %arg2[%c0, %c0_0] : memref<8x27xf32, #tpu.memory_space<vmem>>, vector<8x27xf32>
    %c0_1 = arith.constant 0 : index
    %c0_2 = arith.constant 0 : index
    %1 = vector.load %arg3[%c0_1, %c0_2] : memref<8x1xf32, #tpu.memory_space<vmem>>, vector<8x1xf32>
    %c0_3 = arith.constant 0 : index
    %c0_4 = arith.constant 0 : index
    %c0_5 = arith.constant 0 : index
    %2 = vector.load %arg1[%c0_3, %c0_4, %c0_5] : memref<2x27x256xf32, #tpu.memory_space<vmem>>, vector<1x27x256xf32>
    %3 = vector.shape_cast %2 : vector<1x27x256xf32> to vector<27x256xf32>
    %cst = arith.constant dense<0.000000e+00> : vector<8x256xf32>
    %4 = tpu.matmul %0, %3, %cst {dimension_numbers = #tpu.dot_dimension_numbers<[1], [0], [0], [1], [0, 0, 1, 1], [], []>} : vector<8x27xf32>, vector<27x256xf32>, vector<8x256xf32> -> vector<8x256xf32>
    %5 = vector.broadcast %1 : vector<8x1xf32> to vector<8x256xf32>
    %6 = arith.addf %4, %5 : vector<8x256xf32>
    %cst_6 = arith.constant 5.000000e-01 : f32
    %7 = vector.broadcast %cst_6 : f32 to vector<8x256xf32>
    %8 = arith.mulf %6, %7 : vector<8x256xf32>
    %cst_7 = arith.constant 0.707106769 : f32
    %9 = vector.broadcast %cst_7 : f32 to vector<8x256xf32>
    %10 = arith.mulf %6, %9 : vector<8x256xf32>
    %cst_8 = arith.constant 0.000000e+00 : f32
    %11 = vector.broadcast %cst_8 : f32 to vector<8x256xf32>
    %12 = arith.cmpf oge, %10, %11 : vector<8x256xf32>
    %cst_9 = arith.constant 1.000000e+00 : f32
    %cst_10 = arith.constant -1.000000e+00 : f32
    %13 = vector.broadcast %cst_9 : f32 to vector<8x256xf32>
    %14 = vector.broadcast %cst_10 : f32 to vector<8x256xf32>
    %15 = arith.select %12, %13, %14 : vector<8x256xi1>, vector<8x256xf32>
    %16 = math.absf %10 : vector<8x256xf32>
    %cst_11 = arith.constant 0.327591091 : f32
    %17 = vector.broadcast %cst_11 : f32 to vector<8x256xf32>
    %18 = arith.mulf %17, %16 : vector<8x256xf32>
    %cst_12 = arith.constant 1.000000e+00 : f32
    %19 = vector.broadcast %cst_12 : f32 to vector<8x256xf32>
    %20 = arith.addf %19, %18 : vector<8x256xf32>
    %21 = tpu.reciprocal %20 {approx = true} : vector<8x256xf32> -> vector<8x256xf32>
    %22 = arith.mulf %20, %21 : vector<8x256xf32>
    %cst_13 = arith.constant 2.000000e+00 : f32
    %23 = vector.broadcast %cst_13 : f32 to vector<8x256xf32>
    %24 = arith.subf %23, %22 : vector<8x256xf32>
    %25 = arith.mulf %21, %24 : vector<8x256xf32>
    %cst_14 = arith.constant 1.06140542 : f32
    %26 = vector.broadcast %cst_14 : f32 to vector<8x256xf32>
    %27 = arith.mulf %26, %25 : vector<8x256xf32>
    %cst_15 = arith.constant -1.45315206 : f32
    %28 = vector.broadcast %cst_15 : f32 to vector<8x256xf32>
    %29 = arith.addf %27, %28 : vector<8x256xf32>
    %30 = arith.mulf %29, %25 : vector<8x256xf32>
    %cst_16 = arith.constant 1.42141378 : f32
    %31 = vector.broadcast %cst_16 : f32 to vector<8x256xf32>
    %32 = arith.addf %30, %31 : vector<8x256xf32>
    %33 = arith.mulf %32, %25 : vector<8x256xf32>
    %cst_17 = arith.constant -0.284496725 : f32
    %34 = vector.broadcast %cst_17 : f32 to vector<8x256xf32>
    %35 = arith.addf %33, %34 : vector<8x256xf32>
    %36 = arith.mulf %35, %25 : vector<8x256xf32>
    %cst_18 = arith.constant 0.254829586 : f32
    %37 = vector.broadcast %cst_18 : f32 to vector<8x256xf32>
    %38 = arith.addf %36, %37 : vector<8x256xf32>
    %39 = arith.mulf %38, %25 : vector<8x256xf32>
    %cst_19 = arith.constant 0.000000e+00 : f32
    %40 = vector.broadcast %cst_19 : f32 to vector<8x256xf32>
    %41 = arith.subf %40, %16 : vector<8x256xf32>
    %42 = arith.mulf %41, %16 : vector<8x256xf32>
    %43 = math.exp %42 : vector<8x256xf32>
    %44 = arith.mulf %39, %43 : vector<8x256xf32>
    %cst_20 = arith.constant 1.000000e+00 : f32
    %45 = vector.broadcast %cst_20 : f32 to vector<8x256xf32>
    %46 = arith.subf %45, %44 : vector<8x256xf32>
    %47 = arith.mulf %15, %46 : vector<8x256xf32>
    %cst_21 = arith.constant 1.000000e+00 : f32
    %48 = vector.broadcast %cst_21 : f32 to vector<8x256xf32>
    %49 = arith.addf %47, %48 : vector<8x256xf32>
    %50 = arith.mulf %8, %49 : vector<8x256xf32>
    %c0_22 = arith.constant 0 : index
    %c0_23 = arith.constant 0 : index
    %c0_24 = arith.constant 0 : index
    %51 = vector.load %arg4[%c0_22, %c0_23, %c0_24] : memref<2x8x256xf32, #tpu.memory_space<vmem>>, vector<1x8x256xf32>
    %52 = vector.shape_cast %51 : vector<1x8x256xf32> to vector<8x256xf32>
    %53 = vector.shape_cast %50 : vector<8x256xf32> to vector<1x8x256xf32>
    tpu.vector_store %arg4[%c0_22, %c0_23, %c0_24], %53 {strides = array<i32>} : memref<2x8x256xf32, #tpu.memory_space<vmem>>, vector<1x8x256xf32>,
    %c1 = arith.constant 1 : index
    %c0_25 = arith.constant 0 : index
    %c0_26 = arith.constant 0 : index
    %54 = vector.load %arg1[%c1, %c0_25, %c0_26] : memref<2x27x256xf32, #tpu.memory_space<vmem>>, vector<1x27x256xf32>
    %55 = vector.shape_cast %54 : vector<1x27x256xf32> to vector<27x256xf32>
    %cst_27 = arith.constant dense<0.000000e+00> : vector<8x256xf32>
    %56 = tpu.matmul %0, %55, %cst_27 {dimension_numbers = #tpu.dot_dimension_numbers<[1], [0], [0], [1], [0, 0, 1, 1], [], []>} : vector<8x27xf32>, vector<27x256xf32>, vector<8x256xf32> -> vector<8x256xf32>
    %57 = vector.broadcast %1 : vector<8x1xf32> to vector<8x256xf32>
    %58 = arith.addf %56, %57 : vector<8x256xf32>
    %cst_28 = arith.constant 5.000000e-01 : f32
    %59 = vector.broadcast %cst_28 : f32 to vector<8x256xf32>
    %60 = arith.mulf %58, %59 : vector<8x256xf32>
    %cst_29 = arith.constant 0.707106769 : f32
    %61 = vector.broadcast %cst_29 : f32 to vector<8x256xf32>
    %62 = arith.mulf %58, %61 : vector<8x256xf32>
    %cst_30 = arith.constant 0.000000e+00 : f32
    %63 = vector.broadcast %cst_30 : f32 to vector<8x256xf32>
    %64 = arith.cmpf oge, %62, %63 : vector<8x256xf32>
    %cst_31 = arith.constant 1.000000e+00 : f32
    %cst_32 = arith.constant -1.000000e+00 : f32
    %65 = vector.broadcast %cst_31 : f32 to vector<8x256xf32>
    %66 = vector.broadcast %cst_32 : f32 to vector<8x256xf32>
    %67 = arith.select %64, %65, %66 : vector<8x256xi1>, vector<8x256xf32>
    %68 = math.absf %62 : vector<8x256xf32>
    %cst_33 = arith.constant 0.327591091 : f32
    %69 = vector.broadcast %cst_33 : f32 to vector<8x256xf32>
    %70 = arith.mulf %69, %68 : vector<8x256xf32>
    %cst_34 = arith.constant 1.000000e+00 : f32
    %71 = vector.broadcast %cst_34 : f32 to vector<8x256xf32>
    %72 = arith.addf %71, %70 : vector<8x256xf32>
    %73 = tpu.reciprocal %72 {approx = true} : vector<8x256xf32> -> vector<8x256xf32>
    %74 = arith.mulf %72, %73 : vector<8x256xf32>
    %cst_35 = arith.constant 2.000000e+00 : f32
    %75 = vector.broadcast %cst_35 : f32 to vector<8x256xf32>
    %76 = arith.subf %75, %74 : vector<8x256xf32>
    %77 = arith.mulf %73, %76 : vector<8x256xf32>
    %cst_36 = arith.constant 1.06140542 : f32
    %78 = vector.broadcast %cst_36 : f32 to vector<8x256xf32>
    %79 = arith.mulf %78, %77 : vector<8x256xf32>
    %cst_37 = arith.constant -1.45315206 : f32
    %80 = vector.broadcast %cst_37 : f32 to vector<8x256xf32>
    %81 = arith.addf %79, %80 : vector<8x256xf32>
    %82 = arith.mulf %81, %77 : vector<8x256xf32>
    %cst_38 = arith.constant 1.42141378 : f32
    %83 = vector.broadcast %cst_38 : f32 to vector<8x256xf32>
    %84 = arith.addf %82, %83 : vector<8x256xf32>
    %85 = arith.mulf %84, %77 : vector<8x256xf32>
    %cst_39 = arith.constant -0.284496725 : f32
    %86 = vector.broadcast %cst_39 : f32 to vector<8x256xf32>
    %87 = arith.addf %85, %86 : vector<8x256xf32>
    %88 = arith.mulf %87, %77 : vector<8x256xf32>
    %cst_40 = arith.constant 0.254829586 : f32
    %89 = vector.broadcast %cst_40 : f32 to vector<8x256xf32>
    %90 = arith.addf %88, %89 : vector<8x256xf32>
    %91 = arith.mulf %90, %77 : vector<8x256xf32>
    %cst_41 = arith.constant 0.000000e+00 : f32
    %92 = vector.broadcast %cst_41 : f32 to vector<8x256xf32>
    %93 = arith.subf %92, %68 : vector<8x256xf32>
    %94 = arith.mulf %93, %68 : vector<8x256xf32>
    %95 = math.exp %94 : vector<8x256xf32>
    %96 = arith.mulf %91, %95 : vector<8x256xf32>
    %cst_42 = arith.constant 1.000000e+00 : f32
    %97 = vector.broadcast %cst_42 : f32 to vector<8x256xf32>
    %98 = arith.subf %97, %96 : vector<8x256xf32>
    %99 = arith.mulf %67, %98 : vector<8x256xf32>
    %cst_43 = arith.constant 1.000000e+00 : f32
    %100 = vector.broadcast %cst_43 : f32 to vector<8x256xf32>
    %101 = arith.addf %99, %100 : vector<8x256xf32>
    %102 = arith.mulf %60, %101 : vector<8x256xf32>
    %c1_44 = arith.constant 1 : index
    %c0_45 = arith.constant 0 : index
    %c0_46 = arith.constant 0 : index
    %103 = vector.load %arg4[%c1_44, %c0_45, %c0_46] : memref<2x8x256xf32, #tpu.memory_space<vmem>>, vector<1x8x256xf32>
    %104 = vector.shape_cast %103 : vector<1x8x256xf32> to vector<8x256xf32>
    %105 = vector.shape_cast %102 : vector<8x256xf32> to vector<1x8x256xf32>
    tpu.vector_store %arg4[%c1_44, %c0_45, %c0_46], %105 {strides = array<i32>} : memref<2x8x256xf32, #tpu.memory_space<vmem>>, vector<1x8x256xf32>,
    return
  }
  func.func @transform_0(%arg0: i32) -> (i32, i32, i32) {
    %c0_i32 = arith.constant 0 : i32
    %c0_i32_0 = arith.constant 0 : i32
    %c0_i32_1 = arith.constant 0 : i32
    %c0_i32_2 = arith.constant 0 : i32
    return %c0_i32, %c0_i32_0, %c0_i32_1 : i32, i32, i32
  }
  func.func @transform_1(%arg0: i32) -> (i32, i32) {
    %c0_i32 = arith.constant 0 : i32
    %c0_i32_0 = arith.constant 0 : i32
    %c0_i32_1 = arith.constant 0 : i32
    return %c0_i32, %c0_i32_0 : i32, i32
  }
  func.func @transform_2(%arg0: i32) -> (i32, i32) {
    %c0_i32 = arith.constant 0 : i32
    %c0_i32_0 = arith.constant 0 : i32
    %c0_i32_1 = arith.constant 0 : i32
    return %c0_i32, %c0_i32_0 : i32, i32
  }
  func.func @transform_3(%arg0: i32) -> (i32, i32, i32) {
    %c0_i32 = arith.constant 0 : i32
    %c0_i32_0 = arith.constant 0 : i32
    %c0_i32_1 = arith.constant 0 : i32
    %c0_i32_2 = arith.constant 0 : i32
    return %c0_i32, %c0_i32_0, %c0_i32_1 : i32, i32, i32
  }
}

</mosaic_0001>

<llo_original>
// kernel: tpu_custom_call.1
$region0: #{tpu_custom_call.1}
  #allocation0 [shape = 'u32[]', space=smem, size = 0x4, offset = 0x4, fixed_abs, tag = 'smem constant byte address 0x4 - core index']
  #allocation1 [shape = 'u32[144,128]{1,0:T(1,128)}', space=vmem, size = 0x12000, scoped, tag = 'internal scratch']
  %s0 = inlined_call_operand.vmem [shape: f32[2,27,256], index: 0, kind: input, shape index: {}]
  %s1 = inlined_call_operand.vmem [shape: f32[8,27], index: 1, kind: input, shape index: {}]
  %s2 = inlined_call_operand.vmem [shape: f32[8,1], index: 2, kind: input, shape index: {}]
  %s3 = inlined_call_operand.hbm [shape: f32[2,8,256], index: 3, kind: output, shape index: {}]
  %s4 = sld [smem:[#allocation0]]
  $region22: #{tpu_custom_call.1} parent=0
    _
  %s6 = ssub.s32 1, %s4
  %s7 = scalar_select 0, %s6, %s4
  $region1: #{tpu_custom_call.1} parent=0
    #allocation2 [shape = 'u8[16384]{0}', space=vmem, size = 0x4000, scoped, tag = 'output window, operand 0, single buffered']
    #allocation3 [shape = 's32[1]{0}', space=sflag, size = 0x4, scoped, tag = 'scoped memory for tpu_custom_call.1']
    %8 = vsyncpa [#allocation3], 0
    // Predicated region
    $region2: #{tpu_custom_call.1} parent=1 // pred_check
      _
    $region3: #{tpu_custom_call.1} parent=1 // pred_check_branch
      %10 = sbr.rel (0) target = $region5
    $region4: #{tpu_custom_call.1} parent=1 // pred_region
      _
    $region5: #{tpu_custom_call.1} parent=1 // pred_fallthru
      _
    // Predicated region
    $region6: #{tpu_custom_call.1} parent=1 // pred_check
      _
    $region7: #{tpu_custom_call.1} parent=1 // pred_check_branch
      %12 = sbr.rel (0) target = $region9
    $region8: #{tpu_custom_call.1} parent=1 // pred_region
      _
    $region9: #{tpu_custom_call.1} parent=1 // pred_fallthru
      _
    // Predicated region
    $region10: #{tpu_custom_call.1} parent=1 // pred_check
      _
    $region11: #{tpu_custom_call.1} parent=1 // pred_check_branch
      %14 = sbr.rel (0) target = $region13
    $region12: #{tpu_custom_call.1} parent=1 // pred_region
      _
    $region13: #{tpu_custom_call.1} parent=1 // pred_fallthru
      _
    %v15 = vld [vmem:[%s1] sm:$0xff]
    %v16 = vld [vmem:[%s2] sm:$0xff]
    %v17 = vld [vmem:[%s0] sm:$0xff]
    %v18 = vld [vmem:[%s0 + $0x8] sm:$0xff]
    %v19 = vld [vmem:[%s0 + $0x10] sm:$0xff]
    %v20 = vld [vmem:[%s0 + $0x18] sm:$0xff]
    %v21 = vld [vmem:[%s0 + $0x20] sm:$0xff]
    %v22 = vld [vmem:[%s0 + $0x28] sm:$0xff]
    %v23 = vld [vmem:[%s0 + $0x30] sm:$0x7]
    %v24 = vld [vmem:[%s0 + $0x38] sm:$0x7]
    %26 = vset.pattern.permute.xlu0 0
    %27 = vperm.xlu0 %26, %v16
    %v28 = vpop.permute.xlu0 %27
    %vm30 = vcmask 220160
    %v32 = vsel %vm30, %v15, 0
    %vm34 = vcmask 1042432
    %v36 = vsel %vm34, %v23, 0
    %v39 = vsel %vm34, %v24, 0
    %41 = vmatprep.subr.mxu0 %v18
    %42 = vmatpush1.msra.mxu0 %v17
    %43 = vmatprep.subr.mxu0 %v20
    %44 = vmatpush1.msra.mxu0 %v19
    %45 = vmatprep.subr.mxu0 %v22
    %46 = vmatpush1.msra.mxu0 %v21
    %47 = vmatprep.subr.mxu0 %v39
    %48 = vmatpush1.msra.mxu0 %v36
    %49 = vmatprep.subr.mxu0 0.0
    %50 = vmatpush1.msra.mxu0 0.0
    %51 = vmatprep.subr.mxu0 0.0
    %52 = vmatpush1.msra.mxu0 0.0
    %53 = vmatprep.subr.mxu0 0.0
    %54 = vmatpush1.msra.mxu0 0.0
    %55 = vmatprep.subr.mxu0 0.0
    %56 = vmatpush1.msra.mxu0 0.0
    %57 = vmatprep.subr.mxu0 0.0
    %58 = vmatpush1.msra.mxu0 0.0
    %59 = vmatprep.subr.mxu0 0.0
    %60 = vmatpush1.msra.mxu0 0.0
    %61 = vmatprep.subr.mxu0 0.0
    %62 = vmatpush1.msra.mxu0 0.0
    %63 = vmatprep.subr.mxu0 0.0
    %64 = vmatpush1.msra.mxu0 0.0
    %65 = vmatprep.subr.mxu0 0.0
    %66 = vmatpush1.msra.mxu0 0.0
    %67 = vmatprep.subr.mxu0 0.0
    %68 = vmatpush1.msra.mxu0 0.0
    %69 = vmatprep.subr.mxu0 0.0
    %70 = vmatpush1.msra.mxu0 0.0
    %71 = vmatprep.subr.mxu0 0.0
    %72 = vmatpush1.msra.mxu0 0.0
    %73 = vmatprep.subr.mxu0 0.0
    %74 = vmatpush1.msra.mxu0 0.0
    %75 = vmatprep.subr.mxu0 0.0
    %76 = vmatpush1.msra.mxu0 0.0
    %77 = vmatprep.subr.mxu0 0.0
    %78 = vmatpush1.msra.mxu0 0.0
    %79 = vmatprep.subr.mxu0 0.0
    %80 = vmatpush1.msra.mxu0 0.0
    %81 = vmatprep.subr.mxu0 0.0
    %82 = vmatpush1.msra.mxu0 0.0
    %83 = vmatprep.subr.mxu0 0.0
    %84 = vmatpush1.msra.mxu0 0.0
    %85 = vmatprep.subr.mxu0 0.0
    %86 = vmatpush1.msra.mxu0 0.0
    %87 = vmatprep.subr.mxu0 0.0
    %88 = vmatpush1.msra.mxu0 0.0
    %89 = vmatprep.subr.mxu0 0.0
    %90 = vmatpush1.msra.mxu0 0.0
    %91 = vmatprep.subr.mxu0 0.0
    %92 = vmatpush1.msra.mxu0 0.0
    %93 = vmatprep.subr.mxu0 0.0
    %94 = vmatpush1.msra.mxu0 0.0
    %95 = vmatprep.subr.mxu0 0.0
    %96 = vmatpush1.msra.mxu0 0.0
    %97 = vmatprep.subr.mxu0 0.0
    %98 = vmatpush1.msra.mxu0 0.0
    %99 = vmatprep.subr.mxu0 0.0
    %100 = vmatpush1.msra.mxu0 0.0
    %101 = vmatprep.subr.mxu0 0.0
    %102 = vmatpush1.msra.mxu0 0.0
    %103 = vmatprep.subr.mxu0 0.0
    %104 = vmatpush1.msra.mxu0 0.0
    %105 = vmatprep.mubr.f32.mxu0 0.0
    %106 = vmatmul.mubr.f32.gmra.mrb[0].mxu0 %v32
    %v107 = vpop.f32.mrb[0].mxu0
    %v108 = vadd.f32 %v28, %v107
    %v109 = vpop.f32.mrb[0].mxu0
    %v110 = vadd.f32 %v28, %v109
    %111 = vdwg.mxu0
    %v112 = vmul.f32 %v108, 0.5
    %v113 = vmul.f32 %v110, 0.5
    %v114 = vmul.f32 %v108, 0.70710677
    %v115 = vmul.f32 %v110, 0.70710677
    %vm116 = vcmp.ge.f32.partialorder %v114, 0.0
    %vm117 = vcmp.ge.f32.partialorder %v115, 0.0
    %v118 = vsel %vm116, 1.0, -1.0
    %v119 = vsel %vm117, 1.0, -1.0
    %v120 = vand.u32 2147483647, %v114
    %v121 = vand.u32 2147483647, %v115
    %v122 = vmul.f32 %v120, 0.3275911
    %v123 = vmul.f32 %v121, 0.3275911
    %v124 = vadd.f32 %v122, 1.0
    %v125 = vadd.f32 %v123, 1.0
    %v126 = vrcp.pop %v124
    %v127 = vrcp.pop %v125
    %v128 = vmul.f32 %v124, %v126
    %v129 = vmul.f32 %v125, %v127
    %v130 = vsub.f32 2.0, %v128
    %v131 = vsub.f32 2.0, %v129
    %v132 = vmul.f32 %v126, %v130
    %v133 = vmul.f32 %v127, %v131
    %v134 = vmul.f32 %v132, 1.0614054
    %v135 = vmul.f32 %v133, 1.0614054
    %v136 = vadd.f32 %v134, -1.4531521
    %v137 = vadd.f32 %v135, -1.4531521
    %v138 = vmul.f32 %v136, %v132
    %v139 = vmul.f32 %v137, %v133
    %v140 = vadd.f32 %v138, 1.4214138
    %v141 = vadd.f32 %v139, 1.4214138
    %v142 = vmul.f32 %v140, %v132
    %v143 = vmul.f32 %v141, %v133
    %v144 = vadd.f32 %v142, -0.28449672
    %v145 = vadd.f32 %v143, -0.28449672
    %v146 = vmul.f32 %v144, %v132
    %v147 = vmul.f32 %v145, %v133
    %v148 = vadd.f32 %v146, 0.2548296
    %v149 = vadd.f32 %v147, 0.2548296
    %v150 = vmul.f32 %v148, %v132
    %v151 = vmul.f32 %v149, %v133
    %v152 = vsub.f32 0.0, %v120
    %v153 = vsub.f32 0.0, %v121
    %v154 = vmul.f32 %v152, %v120
    %v155 = vmul.f32 %v153, %v121
    %v156 = vmul.f32 %v154, 1.442695
    %v157 = vpow.pop %v156
    %v158 = vmul.f32 %v155, 1.442695
    %v159 = vpow.pop %v158
    %v160 = vmul.f32 %v150, %v157
    %v161 = vmul.f32 %v151, %v159
    %v162 = vsub.f32 1.0, %v160
    %v163 = vsub.f32 1.0, %v161
    %v164 = vmul.f32 %v118, %v162
    %v165 = vmul.f32 %v119, %v163
    %v166 = vadd.f32 %v164, 1.0
    %v167 = vadd.f32 %v165, 1.0
    %v168 = vmul.f32 %v112, %v166
    %v169 = vmul.f32 %v113, %v167
    %170 = vst [vmem:[#allocation2] sm:$0xff] %v168
    %171 = vst [vmem:[#allocation2 + $0x8] sm:$0xff] %v169
    %s172 = scalar_lea.vmem %s0, 64
    %v173 = vld [vmem:[%s172] sm:$0xff]
    %v174 = vld [vmem:[%s172 + $0x8] sm:$0xff]
    %v175 = vld [vmem:[%s172 + $0x10] sm:$0xff]
    %v176 = vld [vmem:[%s172 + $0x18] sm:$0xff]
    %v177 = vld [vmem:[%s172 + $0x20] sm:$0xff]
    %v178 = vld [vmem:[%s172 + $0x28] sm:$0xff]
    %v179 = vld [vmem:[%s172 + $0x30] sm:$0x7]
    %v180 = vld [vmem:[%s172 + $0x38] sm:$0x7]
    %v182 = vsel %vm34, %v179, 0
    %v185 = vsel %vm34, %v180, 0
    %187 = vmatprep.subr.mxu0 %v174
    %188 = vmatpush1.msra.mxu0 %v173
    %189 = vmatprep.subr.mxu0 %v176
    %190 = vmatpush1.msra.mxu0 %v175
    %191 = vmatprep.subr.mxu0 %v178
    %192 = vmatpush1.msra.mxu0 %v177
    %193 = vmatprep.subr.mxu0 %v185
    %194 = vmatpush1.msra.mxu0 %v182
    %195 = vmatprep.subr.mxu0 0.0
    %196 = vmatpush1.msra.mxu0 0.0
    %197 = vmatprep.subr.mxu0 0.0
    %198 = vmatpush1.msra.mxu0 0.0
    %199 = vmatprep.subr.mxu0 0.0
    %200 = vmatpush1.msra.mxu0 0.0
    %201 = vmatprep.subr.mxu0 0.0
    %202 = vmatpush1.msra.mxu0 0.0
    %203 = vmatprep.subr.mxu0 0.0
    %204 = vmatpush1.msra.mxu0 0.0
    %205 = vmatprep.subr.mxu0 0.0
    %206 = vmatpush1.msra.mxu0 0.0
    %207 = vmatprep.subr.mxu0 0.0
    %208 = vmatpush1.msra.mxu0 0.0
    %209 = vmatprep.subr.mxu0 0.0
    %210 = vmatpush1.msra.mxu0 0.0
    %211 = vmatprep.subr.mxu0 0.0
    %212 = vmatpush1.msra.mxu0 0.0
    %213 = vmatprep.subr.mxu0 0.0
    %214 = vmatpush1.msra.mxu0 0.0
    %215 = vmatprep.subr.mxu0 0.0
    %216 = vmatpush1.msra.mxu0 0.0
    %217 = vmatprep.subr.mxu0 0.0
    %218 = vmatpush1.msra.mxu0 0.0
    %219 = vmatprep.subr.mxu0 0.0
    %220 = vmatpush1.msra.mxu0 0.0
    %221 = vmatprep.subr.mxu0 0.0
    %222 = vmatpush1.msra.mxu0 0.0
    %223 = vmatprep.subr.mxu0 0.0
    %224 = vmatpush1.msra.mxu0 0.0
    %225 = vmatprep.subr.mxu0 0.0
    %226 = vmatpush1.msra.mxu0 0.0
    %227 = vmatprep.subr.mxu0 0.0
    %228 = vmatpush1.msra.mxu0 0.0
    %229 = vmatprep.subr.mxu0 0.0
    %230 = vmatpush1.msra.mxu0 0.0
    %231 = vmatprep.subr.mxu0 0.0
    %232 = vmatpush1.msra.mxu0 0.0
    %233 = vmatprep.subr.mxu0 0.0
    %234 = vmatpush1.msra.mxu0 0.0
    %235 = vmatprep.subr.mxu0 0.0
    %236 = vmatpush1.msra.mxu0 0.0
    %237 = vmatprep.subr.mxu0 0.0
    %238 = vmatpush1.msra.mxu0 0.0
    %239 = vmatprep.subr.mxu0 0.0
    %240 = vmatpush1.msra.mxu0 0.0
    %241 = vmatprep.subr.mxu0 0.0
    %242 = vmatpush1.msra.mxu0 0.0
    %243 = vmatprep.subr.mxu0 0.0
    %244 = vmatpush1.msra.mxu0 0.0
    %245 = vmatprep.subr.mxu0 0.0
    %246 = vmatpush1.msra.mxu0 0.0
    %247 = vmatprep.subr.mxu0 0.0
    %248 = vmatpush1.msra.mxu0 0.0
    %249 = vmatprep.subr.mxu0 0.0
    %250 = vmatpush1.msra.mxu0 0.0
    %251 = vmatprep.mubr.f32.mxu0 0.0
    %252 = vmatmul.mubr.f32.gmra.mrb[0].mxu0 %v32
    %v253 = vpop.f32.mrb[0].mxu0
    %v254 = vadd.f32 %v28, %v253
    %v255 = vpop.f32.mrb[0].mxu0
    %v256 = vadd.f32 %v28, %v255
    %257 = vdwg.mxu0
    %v258 = vmul.f32 %v254, 0.5
    %v259 = vmul.f32 %v256, 0.5
    %v260 = vmul.f32 %v254, 0.70710677
    %v261 = vmul.f32 %v256, 0.70710677
    %vm262 = vcmp.ge.f32.partialorder %v260, 0.0
    %vm263 = vcmp.ge.f32.partialorder %v261, 0.0
    %v264 = vsel %vm262, 1.0, -1.0
    %v265 = vsel %vm263, 1.0, -1.0
    %v266 = vand.u32 2147483647, %v260
    %v267 = vand.u32 2147483647, %v261
    %v268 = vmul.f32 %v266, 0.3275911
    %v269 = vmul.f32 %v267, 0.3275911
    %v270 = vadd.f32 %v268, 1.0
    %v271 = vadd.f32 %v269, 1.0
    %v272 = vrcp.pop %v270
    %v273 = vrcp.pop %v271
    %v274 = vmul.f32 %v270, %v272
    %v275 = vmul.f32 %v271, %v273
    %v276 = vsub.f32 2.0, %v274
    %v277 = vsub.f32 2.0, %v275
    %v278 = vmul.f32 %v272, %v276
    %v279 = vmul.f32 %v273, %v277
    %v280 = vmul.f32 %v278, 1.0614054
    %v281 = vmul.f32 %v279, 1.0614054
    %v282 = vadd.f32 %v280, -1.4531521
    %v283 = vadd.f32 %v281, -1.4531521
    %v284 = vmul.f32 %v282, %v278
    %v285 = vmul.f32 %v283, %v279
    %v286 = vadd.f32 %v284, 1.4214138
    %v287 = vadd.f32 %v285, 1.4214138
    %v288 = vmul.f32 %v286, %v278
    %v289 = vmul.f32 %v287, %v279
    %v290 = vadd.f32 %v288, -0.28449672
    %v291 = vadd.f32 %v289, -0.28449672
    %v292 = vmul.f32 %v290, %v278
    %v293 = vmul.f32 %v291, %v279
    %v294 = vadd.f32 %v292, 0.2548296
    %v295 = vadd.f32 %v293, 0.2548296
    %v296 = vmul.f32 %v294, %v278
    %v297 = vmul.f32 %v295, %v279
    %v298 = vsub.f32 0.0, %v266
    %v299 = vsub.f32 0.0, %v267
    %v300 = vmul.f32 %v298, %v266
    %v301 = vmul.f32 %v299, %v267
    %v302 = vmul.f32 %v300, 1.442695
    %v303 = vpow.pop %v302
    %v304 = vmul.f32 %v301, 1.442695
    %v305 = vpow.pop %v304
    %v306 = vmul.f32 %v296, %v303
    %v307 = vmul.f32 %v297, %v305
    %v308 = vsub.f32 1.0, %v306
    %v309 = vsub.f32 1.0, %v307
    %v310 = vmul.f32 %v264, %v308
    %v311 = vmul.f32 %v265, %v309
    %v312 = vadd.f32 %v310, 1.0
    %v313 = vadd.f32 %v311, 1.0
    %v314 = vmul.f32 %v258, %v312
    %v315 = vmul.f32 %v259, %v313
    %s316 = scalar_lea.vmem [#allocation2], 16
    %317 = vst [vmem:[%s316] sm:$0xff] %v314
    %318 = vst [vmem:[%s316 + $0x8] sm:$0xff] %v315
    // Predicated region
    $region14: #{tpu_custom_call.1} parent=1 // pred_check
      _
    $region15: #{tpu_custom_call.1} parent=1 // pred_check_branch
      %320 = sbr.rel (0) target = $region17
    $region16: #{tpu_custom_call.1} parent=1 // pred_region
      %s322 = ssub.s32 512, 512
      %323 = vsyncadd [#allocation3], %s322
      %s324 = sshll.u32 [#allocation2], 4
      %s325 = int_to_ptr.vmem [resolvable:$true] %s324
      %330 = dma.vmem_to_hbm [thread:$0]  %s325, 512, %s3, [#allocation3], 256, 256, 16
    $region17: #{tpu_custom_call.1} parent=1 // pred_fallthru
      _
    // Predicated region
    $region18: #{tpu_custom_call.1} parent=1 // pred_check
      _
    $region19: #{tpu_custom_call.1} parent=1 // pred_check_branch
      %332 = sbr.rel (0) target = $region21
    $region20: #{tpu_custom_call.1} parent=1 // pred_region
      %333 = dma.done [#allocation3], 512
    $region21: #{tpu_custom_call.1} parent=1 // pred_fallthru
      _
    %334 = vsyncpa [#allocation3], 1

</llo_original>
